<compile_context>
chip_gen: v7x
topology: tpu7x:2x2x1
jax: 0.10.0
libtpu: 0.0.40
codegen_flags: <defaults>
</compile_context>

<pallas_src>
import functools

import jax
import jax.numpy as jnp
from jax import lax
from jax.experimental import pallas as pl
from jax.experimental.pallas import tpu as pltpu


def _round_up(x, m):
    return ((x + m - 1) // m) * m


def _u_flood_kernel(y_pred_ref, y_true_ref, theta_t_ref, w_ref, c_ref, *,
                    n_total: int, bag_number: int):
    p = pl.program_id(0)              # parallel chunk (megacore axis)
    t = pl.program_id(1)              # tile inside chunk (reduction axis)

    # Init the resident partial accumulators once per chunk.
    @pl.when(t == 0)
    def _():
        w_ref[...] = jnp.zeros_like(w_ref)
        c_ref[...] = jnp.zeros_like(c_ref)

    logits = y_pred_ref[...].astype(jnp.float32)        # (TN, C) upcast after load
    labels = y_true_ref[...]                            # (TN, 1) i32
    tn = logits.shape[0]
    b = bag_number

    # Global row index for bounds masking (handles partial / clamped tail tiles).
    block_idx = p * pl.num_programs(1) + t
    local_row = lax.broadcasted_iota(jnp.int32, (tn, 1), 0)
    row_valid = (block_idx * tn + local_row) < n_total  # (TN, 1) bool

    # Numerically stable -log_softmax.
    row_max = jnp.max(logits, axis=-1, keepdims=True)                   # (TN, 1)
    lse = row_max + jnp.log(jnp.sum(jnp.exp(logits - row_max),
                                    axis=-1, keepdims=True))            # (TN, 1)
    nll = lse - logits                                                  # (TN, C)

    # MXU-native (M,K)x(K,N): per_sample[n, i] = sum_j nll[n, j] * theta_T[j, i]
    per_sample = jnp.dot(nll, theta_t_ref[...],
                         preferred_element_type=jnp.float32)            # (TN, B)

    # Fused bag-membership mask (no materialized one-hot f32 matrix).
    bag_ids = lax.broadcasted_iota(jnp.int32, (tn, b), 1)               # (TN, B)
    member = (bag_ids == labels) & row_valid                            # (TN, B) bool

    w_tile = jnp.sum(jnp.where(member, per_sample, 0.0),
                     axis=0, keepdims=True)                             # (1, B)
    c_tile = jnp.sum(jnp.where(member, 1.0, 0.0),
                     axis=0, keepdims=True)                             # (1, B)

    w_ref[...] = w_ref[...] + w_tile[None]                              # (1, 1, B)
    c_ref[...] = c_ref[...] + c_tile[None]


def u_flood(y_true, y_pred, theta, flood_level, *, num_parallel=2, tile_n=None):
    """JAX/Pallas equivalent of U_flood.forward(y_true, y_pred)."""
    n, c = y_pred.shape
    b, c2 = theta.shape
    assert c2 == c, "theta is (Bag_Number, Class_Number)"

    theta_t = jnp.linalg.pinv(theta.astype(jnp.float32))      # (C, B)  SVD glue
    y_true_2d = y_true.astype(jnp.int32).reshape(n, 1)

    p = max(1, int(num_parallel))
    if tile_n is None:
        # Keep 2x (double-buffer) * TN * C * itemsize well under the scoped VMEM
        # limit (16 MiB v5e / 32 MiB v6e,v7x default; v7x has 64 MiB physical).
        vmem_budget = 8 << 20
        bytes_per_row = c * jnp.dtype(y_pred.dtype).itemsize
        tn = min(512, max(8, vmem_budget // (2 * bytes_per_row)))
        tn = max(8, (tn // 8) * 8)
        tn = min(tn, _round_up(pl.cdiv(n, p), 8))
    else:
        tn = int(tile_n)
    if n < 8:
        tn = n                        # block dim may equal the full (tiny) array dim
    tiles_per_chunk = pl.cdiv(pl.cdiv(n, tn), p)
    grid = (p, tiles_per_chunk)

    kernel = functools.partial(_u_flood_kernel, n_total=n, bag_number=b)

    w_part, c_part = pl.pallas_call(
        kernel,
        out_shape=(
            jax.ShapeDtypeStruct((p, 1, b), jnp.float32),   # partial weighted sums
            jax.ShapeDtypeStruct((p, 1, b), jnp.float32),   # partial counts
        ),
        grid_spec=pltpu.PrefetchScalarGridSpec(
            num_scalar_prefetch=0,
            grid=grid,
            in_specs=[
                # y_pred (N, C): tiled over rows, kept in its input dtype.
                pl.BlockSpec((tn, c), lambda pi, ti: (pi * tiles_per_chunk + ti, 0)),
                # y_true (N, 1)
                pl.BlockSpec((tn, 1), lambda pi, ti: (pi * tiles_per_chunk + ti, 0)),
                # theta_T (C, B): untiled, resident.
                pl.BlockSpec((c, b), lambda pi, ti: (0, 0)),
            ],
            out_specs=[
                pl.BlockSpec((1, 1, b), lambda pi, ti: (pi, 0, 0)),
                pl.BlockSpec((1, 1, b), lambda pi, ti: (pi, 0, 0)),
            ],
        ),
        compiler_params=pltpu.CompilerParams(
            dimension_semantics=("parallel", "arbitrary")),
    )(y_pred, y_true_2d, theta_t)

    # Tiny finalize in plain JAX: combine cross-core partials, per-bag mean,
    # empty-bag handling (PyTorch keeps risk_[i] = 1.0), flood transform.
    weighted = jnp.sum(w_part, axis=(0, 1))                    # (B,)
    counts = jnp.sum(c_part, axis=(0, 1))                      # (B,)
    per_bag = jnp.where(counts > 0.0,
                        weighted / jnp.maximum(counts, 1.0), 1.0)
    total = jnp.sum(per_bag)
    flood = jnp.float32(flood_level)
    return jnp.abs(total - flood) + flood


def u_flood_ref(y_true, y_pred, theta, flood_level):
    """Pure-JAX reference of the PyTorch forward, for a sanity check."""
    b, c = theta.shape
    theta_t = jnp.linalg.pinv(theta.astype(jnp.float32))              # (C, B)
    nll = -jax.nn.log_softmax(y_pred.astype(jnp.float32), axis=-1)    # (N, C)
    member = (y_true[:, None] == jnp.arange(b)[None, :]).astype(jnp.float32)  # (N, B)
    counts = member.sum(0)                                            # (B,)
    s = member.T @ nll                                                # (B, C)
    mean_nll = s / jnp.maximum(counts, 1.0)[:, None]
    weighted = jnp.sum(mean_nll * theta_t.T, axis=1)                  # (B,)
    per_bag = jnp.where(counts > 0, weighted, 1.0)
    total = per_bag.sum()
    return jnp.abs(total - flood_level) + flood_level


if __name__ == "__main__":
    key = jax.random.PRNGKey(0)
    k_theta, k_pred, k_true = jax.random.split(key, 3)

    Bag_Number = 4
    Class_Number = 8
    N = 16
    flood_level = 0.1

    theta = jax.random.normal(k_theta, (Bag_Number, Class_Number), dtype=jnp.float32)
    y_pred = jax.random.normal(k_pred, (N, Class_Number), dtype=jnp.float32)
    y_true = jax.random.randint(k_true, (N,), 0, Bag_Number, dtype=jnp.int32)

    risk = u_flood(y_true, y_pred, theta, flood_level)
    jax.block_until_ready(risk)

    risk_ref = u_flood_ref(y_true, y_pred, theta, flood_level)
    jax.block_until_ready(risk_ref)

    if not jnp.allclose(risk, risk_ref, rtol=1e-4, atol=1e-4):
        raise AssertionError(f"mismatch: pallas={risk} ref={risk_ref}")

    print("KERNEL_OK")
</pallas_src>

<mosaic_0001>
module attributes {stable_mosaic.version = 11 : i64} {
  func.func @_u_flood_kernel(%arg0: i32, %arg1: i32, %arg2: memref<8x8xf32, #tpu.memory_space<vmem>>, %arg3: memref<8x1xi32, #tpu.memory_space<vmem>>, %arg4: memref<8x4xf32, #tpu.memory_space<vmem>>, %arg5: memref<1x1x4xf32, #tpu.memory_space<vmem>>, %arg6: memref<1x1x4xf32, #tpu.memory_space<vmem>>) attributes {dimension_semantics = [#tpu.dimension_semantics<parallel>, #tpu.dimension_semantics<arbitrary>], iteration_bounds = array<i64: 2, 1>, scalar_prefetch = 0 : i64, scratch_operands = 0 : i64, tpu.core_type = #tpu.core_type<tc>, window_params = [{transform_indices = @transform_0, window_bounds = array<i64: 8, 8>}, {transform_indices = @transform_1, window_bounds = array<i64: 8, 1>}, {pipeline_mode = #tpu.pipeline_mode<synchronous>, transform_indices = @transform_2, window_bounds = array<i64: 8, 4>}, {transform_indices = @transform_3, window_bounds = array<i64: 1, 1, 4>}, {transform_indices = @transform_4, window_bounds = array<i64: 1, 1, 4>}]} {
    %c0_i32 = arith.constant 0 : i32
    %0 = arith.cmpi eq, %arg1, %c0_i32 : i32
    %1 = arith.extui %0 : i1 to i32
    %c0_i32_0 = arith.constant 0 : i32
    %2 = arith.cmpi ne, %1, %c0_i32_0 : i32
    scf.if %2 {
      %cst_25 = arith.constant 0.000000e+00 : f32
      %48 = vector.broadcast %cst_25 : f32 to vector<1x1x4xf32>
      %c0_26 = arith.constant 0 : index
      %c0_27 = arith.constant 0 : index
      %c0_28 = arith.constant 0 : index
      %49 = vector.load %arg5[%c0_26, %c0_27, %c0_28] : memref<1x1x4xf32, #tpu.memory_space<vmem>>, vector<1x1x4xf32>
      tpu.vector_store %arg5[%c0_26, %c0_27, %c0_28], %48 {strides = array<i32>} : memref<1x1x4xf32, #tpu.memory_space<vmem>>, vector<1x1x4xf32>,
      %cst_29 = arith.constant 0.000000e+00 : f32
      %50 = vector.broadcast %cst_29 : f32 to vector<1x1x4xf32>
      %c0_30 = arith.constant 0 : index
      %c0_31 = arith.constant 0 : index
      %c0_32 = arith.constant 0 : index
      %51 = vector.load %arg6[%c0_30, %c0_31, %c0_32] : memref<1x1x4xf32, #tpu.memory_space<vmem>>, vector<1x1x4xf32>
      tpu.vector_store %arg6[%c0_30, %c0_31, %c0_32], %50 {strides = array<i32>} : memref<1x1x4xf32, #tpu.memory_space<vmem>>, vector<1x1x4xf32>,
    } else {
    }
    %c0 = arith.constant 0 : index
    %c0_1 = arith.constant 0 : index
    %3 = vector.load %arg2[%c0, %c0_1] : memref<8x8xf32, #tpu.memory_space<vmem>>, vector<8x8xf32>
    %c0_2 = arith.constant 0 : index
    %c0_3 = arith.constant 0 : index
    %4 = vector.load %arg3[%c0_2, %c0_3] : memref<8x1xi32, #tpu.memory_space<vmem>>, vector<8x1xi32>
    %c1_i32 = arith.constant 1 : i32
    %5 = arith.muli %arg0, %c1_i32 : i32
    %6 = arith.addi %5, %arg1 : i32
    %7 = tpu.iota {dimensions = array<i32: 0>} : vector<8x1xi32>
    %c8_i32 = arith.constant 8 : i32
    %8 = arith.muli %6, %c8_i32 : i32
    %9 = vector.broadcast %8 : i32 to vector<8x1xi32>
    %10 = arith.addi %9, %7 : vector<8x1xi32>
    %c16_i32 = arith.constant 16 : i32
    %11 = vector.broadcast %c16_i32 : i32 to vector<8x1xi32>
    %12 = arith.cmpi slt, %10, %11 : vector<8x1xi32>
    %cst = arith.constant dense<0xFF800000> : vector<8xf32>
    %13 = vector.multi_reduction <maximumf>, %3, %cst [1] : vector<8x8xf32> to vector<8xf32>
    %14 = vector.shape_cast %13 : vector<8xf32> to vector<8x1xf32>
    %15 = vector.broadcast %14 : vector<8x1xf32> to vector<8x8xf32>
    %16 = arith.subf %3, %15 : vector<8x8xf32>
    %17 = math.exp %16 : vector<8x8xf32>
    %cst_4 = arith.constant dense<0.000000e+00> : vector<8xf32>
    %18 = vector.multi_reduction <add>, %17, %cst_4 [1] : vector<8x8xf32> to vector<8xf32>
    %19 = vector.shape_cast %18 : vector<8xf32> to vector<8x1xf32>
    %20 = math.log %19 : vector<8x1xf32>
    %21 = arith.addf %14, %20 : vector<8x1xf32>
    %22 = vector.broadcast %21 : vector<8x1xf32> to vector<8x8xf32>
    %23 = arith.subf %22, %3 : vector<8x8xf32>
    %c0_5 = arith.constant 0 : index
    %c0_6 = arith.constant 0 : index
    %24 = vector.load %arg4[%c0_5, %c0_6] : memref<8x4xf32, #tpu.memory_space<vmem>>, vector<8x4xf32>
    %cst_7 = arith.constant dense<0.000000e+00> : vector<8x4xf32>
    %25 = tpu.matmul %23, %24, %cst_7 {dimension_numbers = #tpu.dot_dimension_numbers<[1], [0], [0], [1], [0, 0, 1, 1], [], []>} : vector<8x8xf32>, vector<8x4xf32>, vector<8x4xf32> -> vector<8x4xf32>
    %26 = tpu.iota {dimensions = array<i32: 1>} : vector<8x4xi32>
    %27 = vector.broadcast %4 : vector<8x1xi32> to vector<8x4xi32>
    %28 = arith.cmpi eq, %26, %27 : vector<8x4xi32>
    %29 = vector.broadcast %12 : vector<8x1xi1> to vector<8x4xi1>
    %30 = arith.andi %28, %29 : vector<8x4xi1>
    %cst_8 = arith.constant 0.000000e+00 : f32
    %31 = vector.broadcast %cst_8 : f32 to vector<8x4xf32>
    %32 = arith.select %30, %25, %31 : vector<8x4xi1>, vector<8x4xf32>
    %cst_9 = arith.constant dense<0.000000e+00> : vector<4xf32>
    %33 = vector.multi_reduction <add>, %32, %cst_9 [0] : vector<8x4xf32> to vector<4xf32>
    %34 = vector.shape_cast %33 : vector<4xf32> to vector<1x4xf32>
    %cst_10 = arith.constant 1.000000e+00 : f32
    %cst_11 = arith.constant 0.000000e+00 : f32
    %35 = vector.broadcast %cst_10 : f32 to vector<8x4xf32>
    %36 = vector.broadcast %cst_11 : f32 to vector<8x4xf32>
    %37 = arith.select %30, %35, %36 : vector<8x4xi1>, vector<8x4xf32>
    %cst_12 = arith.constant dense<0.000000e+00> : vector<4xf32>
    %38 = vector.multi_reduction <add>, %37, %cst_12 [0] : vector<8x4xf32> to vector<4xf32>
    %39 = vector.shape_cast %38 : vector<4xf32> to vector<1x4xf32>
    %c0_13 = arith.constant 0 : index
    %c0_14 = arith.constant 0 : index
    %c0_15 = arith.constant 0 : index
    %40 = vector.load %arg5[%c0_13, %c0_14, %c0_15] : memref<1x1x4xf32, #tpu.memory_space<vmem>>, vector<1x1x4xf32>
    %41 = vector.shape_cast %34 : vector<1x4xf32> to vector<1x1x4xf32>
    %42 = arith.addf %40, %41 : vector<1x1x4xf32>
    %c0_16 = arith.constant 0 : index
    %c0_17 = arith.constant 0 : index
    %c0_18 = arith.constant 0 : index
    %43 = vector.load %arg5[%c0_16, %c0_17, %c0_18] : memref<1x1x4xf32, #tpu.memory_space<vmem>>, vector<1x1x4xf32>
    tpu.vector_store %arg5[%c0_16, %c0_17, %c0_18], %42 {strides = array<i32>} : memref<1x1x4xf32, #tpu.memory_space<vmem>>, vector<1x1x4xf32>,
    %c0_19 = arith.constant 0 : index
    %c0_20 = arith.constant 0 : index
    %c0_21 = arith.constant 0 : index
    %44 = vector.load %arg6[%c0_19, %c0_20, %c0_21] : memref<1x1x4xf32, #tpu.memory_space<vmem>>, vector<1x1x4xf32>
    %45 = vector.shape_cast %39 : vector<1x4xf32> to vector<1x1x4xf32>
    %46 = arith.addf %44, %45 : vector<1x1x4xf32>
    %c0_22 = arith.constant 0 : index
    %c0_23 = arith.constant 0 : index
    %c0_24 = arith.constant 0 : index
    %47 = vector.load %arg6[%c0_22, %c0_23, %c0_24] : memref<1x1x4xf32, #tpu.memory_space<vmem>>, vector<1x1x4xf32>
    tpu.vector_store %arg6[%c0_22, %c0_23, %c0_24], %46 {strides = array<i32>} : memref<1x1x4xf32, #tpu.memory_space<vmem>>, vector<1x1x4xf32>,
    return
  }
  func.func @transform_0(%arg0: i32, %arg1: i32) -> (i32, i32) {
    %c1_i32 = arith.constant 1 : i32
    %0 = arith.muli %arg0, %c1_i32 : i32
    %1 = arith.addi %0, %arg1 : i32
    %c0_i32 = arith.constant 0 : i32
    %c0_i32_0 = arith.constant 0 : i32
    return %1, %c0_i32 : i32, i32
  }
  func.func @transform_1(%arg0: i32, %arg1: i32) -> (i32, i32) {
    %c1_i32 = arith.constant 1 : i32
    %0 = arith.muli %arg0, %c1_i32 : i32
    %1 = arith.addi %0, %arg1 : i32
    %c0_i32 = arith.constant 0 : i32
    %c0_i32_0 = arith.constant 0 : i32
    return %1, %c0_i32 : i32, i32
  }
  func.func @transform_2(%arg0: i32, %arg1: i32) -> (i32, i32) {
    %c0_i32 = arith.constant 0 : i32
    %c0_i32_0 = arith.constant 0 : i32
    %c0_i32_1 = arith.constant 0 : i32
    return %c0_i32, %c0_i32_0 : i32, i32
  }
  func.func @transform_3(%arg0: i32, %arg1: i32) -> (i32, i32, i32) {
    %c0_i32 = arith.constant 0 : i32
    %c0_i32_0 = arith.constant 0 : i32
    %c0_i32_1 = arith.constant 0 : i32
    return %arg0, %c0_i32, %c0_i32_0 : i32, i32, i32
  }
  func.func @transform_4(%arg0: i32, %arg1: i32) -> (i32, i32, i32) {
    %c0_i32 = arith.constant 0 : i32
    %c0_i32_0 = arith.constant 0 : i32
    %c0_i32_1 = arith.constant 0 : i32
    return %arg0, %c0_i32, %c0_i32_0 : i32, i32, i32
  }
}

</mosaic_0001>

<llo_original>
// kernel: tpu_custom_call.1
$region0: #{tpu_custom_call.1}
  #allocation0 [shape = 'u32[]', space=smem, size = 0x4, offset = 0x4, fixed_abs, tag = 'smem constant byte address 0x4 - core index']
  #allocation1 [shape = 'u32[144,128]{1,0:T(1,128)}', space=vmem, size = 0x12000, scoped, tag = 'internal scratch']
  %s0 = inlined_call_operand.vmem [shape: f32[16,8], index: 0, kind: input, shape index: {}]
  %s1 = inlined_call_operand.vmem [shape: s32[16,1], index: 1, kind: input, shape index: {}]
  %s2 = inlined_call_operand.vmem [shape: f32[8,4], index: 2, kind: input, shape index: {}]
  %s3 = inlined_call_operand.hbm [shape: f32[2,1,4], index: 3, kind: output, shape index: {0}]
  %s4 = inlined_call_operand.hbm [shape: f32[2,1,4], index: 4, kind: output, shape index: {1}]
  %5 = xla_tuple %s3, %s4
  %s6 = sld [smem:[#allocation0]]
  $region57: #{tpu_custom_call.1} parent=0
    _
  %s8 = ssub.s32 1, %s6
  %s9 = scalar_select 0, %s8, %s6
  $region1: #{tpu_custom_call.1} parent=0
    #allocation2 [shape = 'u8[1024]{0}', space=vmem, size = 0x400, scoped, tag = 'output window, operand 0']
    #allocation3 [shape = 's32[2]{0}', space=sflag, size = 0x8, scoped, tag = 'scoped memory for tpu_custom_call.1']
    #allocation4 [shape = 'u8[1024]{0}', space=vmem, size = 0x400, scoped, tag = 'output window, operand 1']
    #allocation5 [shape = 's32[2]{0}', space=sflag, size = 0x8, scoped, tag = 'scoped memory for tpu_custom_call.1']
    %10 = vsyncpa [#allocation3], 0
    %s11 = scalar_lea.sflag [#allocation3], 1
    %12 = vsyncpa %s11, 0
    %13 = vsyncpa [#allocation5], 0
    %s14 = scalar_lea.sflag [#allocation5], 1
    %15 = vsyncpa %s14, 0
    loop: start=0, step=1, limit=4
    $region2: #{tpu_custom_call.1} parent=1 // loop_pre_header
      _
    $region3: #{tpu_custom_call.1} parent=1 // loop_header
      %s17 = sphi 0, %s21
      %p18 = scmp.ge.s32.totalorder %s17, 4
      %s24 = sphi 0, %s36
      %s25 = sphi 0, %s32
      %s26 = sphi 0, %s24
      %s27 = sphi 0, %s25
      %s28 = sphi 0, %s26
      %s29 = sphi 0, %s27
      %s41 = sphi 0, %s43
      %s44 = sphi 0, %s41
      %s45 = sphi 0, %s44
      %s61 = sphi 0, %s45
      %s69 = sphi 0, %s71
      %s72 = sphi 0, %s69
      %s73 = sphi 0, %s72
      %s89 = sphi 0, %s73
      %s93 = sphi 0, %s93
      %s95 = sphi 0, %s93
      %s96 = sphi 0, %s95
      %s110 = sphi 0, %s96
      %s116 = sphi 0, %s118
      %s119 = sphi 0, %s116
      %s120 = sphi 0, %s119
      %s136 = sphi 0, %s120
      %s142 = sphi 0, %s144
      %s145 = sphi 0, %s142
      %s146 = sphi 0, %s145
      %s162 = sphi 0, %s146
    $region4: #{tpu_custom_call.1} parent=1 // loop_header_branch
      %20 = sbr.rel (%p18) target = $region8
    $region5: #{tpu_custom_call.1} parent=1 // loop_body
      %s22 = ssub.s32 %s17, 1
      %s23 = ssub.s32 %s17, 2
      %s30 = sadd.s32 1, %s25
      %p31 = scmp.ge.s32.totalorder %s30, 1
      %s32 = scalar_select %p31, 0, %s30
      %s33 = sadd.s32 1, %s24
      %s34 = scalar_select %p31, %s33, %s24
      %p35 = scmp.ge.s32.totalorder %s34, 2
      %s36 = scalar_select %p35, 0, %s34
      %s37 = sadd.s32 %s24, %s25
      %s38 = sadd.s32 %s36, %s32
      %s39 = ssub.s32 %s37, %s38
      %p40 = scmp.eq.s32.totalorder %s39, 0
      %s42 = sadd.s32 %s41, 1
      %s43 = scalar_select %p40, %s41, %s42
      %p46 = pneg %p40
      %p47 = scmp.eq.s32.totalorder %s17, 1
      %p48 = por %p46, %p47
      %p49 = scmp.ne.s32.totalorder %s41, %s44
      %p50 = scmp.eq.s32.totalorder %s17, 0
      %p51 = por %p49, %p50
      %p52 = scmp.ne.s32.totalorder %s41, %s44
      %p53 = scmp.eq.s32.totalorder %s22, 1
      %p54 = por %p52, %p53
      %p55 = scmp.ne.s32.totalorder %s44, %s45
      %p56 = scmp.eq.s32.totalorder %s22, 0
      %p57 = por %p55, %p56
      %p58 = scmp.ne.s32.totalorder %s44, %s45
      %p59 = scmp.eq.s32.totalorder %s23, 1
      %p60 = por %p58, %p59
      %p62 = scmp.ne.s32.totalorder %s45, %s61
      %p63 = scmp.eq.s32.totalorder %s23, 0
      %p64 = por %p62, %p63
      %s65 = sadd.s32 %s24, %s25
      %s66 = sadd.s32 %s36, %s32
      %s67 = ssub.s32 %s65, %s66
      %p68 = scmp.eq.s32.totalorder %s67, 0
      %s70 = sadd.s32 %s69, 1
      %s71 = scalar_select %p68, %s69, %s70
      %p74 = pneg %p68
      %p75 = scmp.eq.s32.totalorder %s17, 1
      %p76 = por %p74, %p75
      %p77 = scmp.ne.s32.totalorder %s69, %s72
      %p78 = scmp.eq.s32.totalorder %s17, 0
      %p79 = por %p77, %p78
      %p80 = scmp.ne.s32.totalorder %s69, %s72
      %p81 = scmp.eq.s32.totalorder %s22, 1
      %p82 = por %p80, %p81
      %p83 = scmp.ne.s32.totalorder %s72, %s73
      %p84 = scmp.eq.s32.totalorder %s22, 0
      %p85 = por %p83, %p84
      %p86 = scmp.ne.s32.totalorder %s72, %s73
      %p87 = scmp.eq.s32.totalorder %s23, 1
      %p88 = por %p86, %p87
      %p90 = scmp.ne.s32.totalorder %s73, %s89
      %p91 = scmp.eq.s32.totalorder %s23, 0
      %p92 = por %p90, %p91
      %s94 = sadd.s32 %s93, 1
      %p97 = scmp.eq.s32.totalorder %s17, 1
      %p98 = scmp.ne.s32.totalorder %s93, %s95
      %p99 = scmp.eq.s32.totalorder %s17, 0
      %p100 = por %p98, %p99
      %p101 = scmp.ne.s32.totalorder %s93, %s95
      %p102 = scmp.eq.s32.totalorder %s22, 1
      %p103 = por %p101, %p102
      %p104 = scmp.ne.s32.totalorder %s95, %s96
      %p105 = scmp.eq.s32.totalorder %s22, 0
      %p106 = por %p104, %p105
      %p107 = scmp.ne.s32.totalorder %s95, %s96
      %p108 = scmp.eq.s32.totalorder %s23, 1
      %p109 = por %p107, %p108
      %p111 = scmp.ne.s32.totalorder %s96, %s110
      %p112 = scmp.eq.s32.totalorder %s23, 0
      %p113 = por %p111, %p112
      %s114 = ssub.s32 %s24, %s36
      %p115 = scmp.eq.s32.totalorder %s114, 0
      %s117 = sadd.s32 %s116, 1
      %s118 = scalar_select %p115, %s116, %s117
      %p121 = pneg %p115
      %p122 = scmp.eq.s32.totalorder %s17, 1
      %p123 = por %p121, %p122
      %p124 = scmp.ne.s32.totalorder %s116, %s119
      %p125 = scmp.eq.s32.totalorder %s17, 0
      %p126 = por %p124, %p125
      %p127 = scmp.ne.s32.totalorder %s116, %s119
      %p128 = scmp.eq.s32.totalorder %s22, 1
      %p129 = por %p127, %p128
      %p130 = scmp.ne.s32.totalorder %s119, %s120
      %p131 = scmp.eq.s32.totalorder %s22, 0
      %p132 = por %p130, %p131
      %p133 = scmp.ne.s32.totalorder %s119, %s120
      %p134 = scmp.eq.s32.totalorder %s23, 1
      %p135 = por %p133, %p134
      %p137 = scmp.ne.s32.totalorder %s120, %s136
      %p138 = scmp.eq.s32.totalorder %s23, 0
      %p139 = por %p137, %p138
      %s140 = ssub.s32 %s24, %s36
      %p141 = scmp.eq.s32.totalorder %s140, 0
      %s143 = sadd.s32 %s142, 1
      %s144 = scalar_select %p141, %s142, %s143
      %p147 = pneg %p141
      %p148 = scmp.eq.s32.totalorder %s17, 1
      %p149 = por %p147, %p148
      %p150 = scmp.ne.s32.totalorder %s142, %s145
      %p151 = scmp.eq.s32.totalorder %s17, 0
      %p152 = por %p150, %p151
      %p153 = scmp.ne.s32.totalorder %s142, %s145
      %p154 = scmp.eq.s32.totalorder %s22, 1
      %p155 = por %p153, %p154
      %p156 = scmp.ne.s32.totalorder %s145, %s146
      %p157 = scmp.eq.s32.totalorder %s22, 0
      %p158 = por %p156, %p157
      %p159 = scmp.ne.s32.totalorder %s145, %s146
      %p160 = scmp.eq.s32.totalorder %s23, 1
      %p161 = por %p159, %p160
      %p163 = scmp.ne.s32.totalorder %s146, %s162
      %p164 = scmp.eq.s32.totalorder %s23, 0
      %p165 = por %p163, %p164
      %p166 = scmp.le.s32.totalorder 1, %s17
      %p167 = scmp.lt.s32.totalorder %s17, 3
      %p168 = pnand %p166, %p167
      %p169 = pneg %p168
      // Predicated region
      $region9: #{tpu_custom_call.1} parent=5 // pred_check
        _
      $region10: #{tpu_custom_call.1} parent=5 // pred_check_branch
        %171 = sbr.rel (%p168) target = $region12
      $region11: #{tpu_custom_call.1} parent=5 // pred_region
        %s172 = ssub.s32 %s17, 1
        // Predicated region
        $region13: #{tpu_custom_call.1} parent=11 // pred_check
          %p173 = pneg %p106
        $region14: #{tpu_custom_call.1} parent=11 // pred_check_branch
          %175 = sbr.rel (%p173) target = $region16
        $region15: #{tpu_custom_call.1} parent=11 // pred_region
          _
        $region16: #{tpu_custom_call.1} parent=11 // pred_fallthru
          _
      $region12: #{tpu_custom_call.1} parent=5 // pred_fallthru
        _
      %p176 = scmp.lt.s32.totalorder %s17, 2
      // Predicated region
      $region17: #{tpu_custom_call.1} parent=5 // pred_check
        %p177 = pneg %p176
      $region18: #{tpu_custom_call.1} parent=5 // pred_check_branch
        %179 = sbr.rel (%p177) target = $region20
      $region19: #{tpu_custom_call.1} parent=5 // pred_region
        // Predicated region
        $region21: #{tpu_custom_call.1} parent=19 // pred_check
          %p180 = pneg %p51
        $region22: #{tpu_custom_call.1} parent=19 // pred_check_branch
          %182 = sbr.rel (%p180) target = $region24
        $region23: #{tpu_custom_call.1} parent=19 // pred_region
          %s183 = sadd.s32 %s24, %s25
          %p184 = scmp.lt.s32.totalorder %s183, 1
          %s185 = scalar_select %p184, %s183, 1
          %s186 = smul.addr %s185, 8
          %s187 = scalar_lea.vmem %s0, %s186
          %s188 = sadd.s32 %s24, %s25
        $region24: #{tpu_custom_call.1} parent=19 // pred_fallthru
          _
        // Predicated region
        $region25: #{tpu_custom_call.1} parent=19 // pred_check
          %p189 = pneg %p79
        $region26: #{tpu_custom_call.1} parent=19 // pred_check_branch
          %191 = sbr.rel (%p189) target = $region28
        $region27: #{tpu_custom_call.1} parent=19 // pred_region
          %s192 = sadd.s32 %s24, %s25
          %p193 = scmp.lt.s32.totalorder %s192, 1
          %s194 = scalar_select %p193, %s192, 1
          %s195 = smul.addr %s194, 8
          %s196 = scalar_lea.vmem %s1, %s195
          %s197 = sadd.s32 %s24, %s25
        $region28: #{tpu_custom_call.1} parent=19 // pred_fallthru
          _
      $region20: #{tpu_custom_call.1} parent=5 // pred_fallthru
        _
      %p198 = scmp.le.s32.totalorder 1, %s17
      %p199 = scmp.lt.s32.totalorder %s17, 3
      %p200 = pnand %p198, %p199
      %p201 = pneg %p200
      // Predicated region
      $region29: #{tpu_custom_call.1} parent=5 // pred_check
        _
      $region30: #{tpu_custom_call.1} parent=5 // pred_check_branch
        %203 = sbr.rel (%p200) target = $region32
      $region31: #{tpu_custom_call.1} parent=5 // pred_region
        %s204 = ssub.s32 %s17, 1
        %s205 = sadd.s32 %s26, %s27
        %p206 = scmp.lt.s32.totalorder %s205, 1
        %s207 = scalar_select %p206, %s205, 1
        %s208 = smul.addr %s207, 8
        %s209 = scalar_lea.vmem %s0, %s208
        %p210 = pneg %p57
        %p211 = pneg %p54
        %s212 = sadd.s32 %s26, %s27
        %p213 = scmp.lt.s32.totalorder %s212, 1
        %s214 = scalar_select %p213, %s212, 1
        %s215 = smul.addr %s214, 8
        %s216 = scalar_lea.vmem %s1, %s215
        %p217 = pneg %p85
        %p218 = pneg %p82
        %p219 = pneg %p106
        %p220 = pneg %p103
        %p221 = pneg %p132
        %p222 = pneg %p129
        %s223 = sand.u32 %s119, 1
        %s224 = scalar_lea.sflag [#allocation3], %s223
        %s225 = sand.u32 %s119, 1
        %s226 = scalar_lea.vmem [#allocation2], %s225
        %p227 = pneg %p158
        %p228 = pneg %p155
        %s229 = sand.u32 %s145, 1
        %s230 = scalar_lea.sflag [#allocation5], %s229
        %s231 = sand.u32 %s145, 1
        %s232 = scalar_lea.vmem [#allocation4], %s231
        %s233 = sadd.s32 %s26, %s27
        %p234 = scmp.lt.s32.totalorder %s233, 1
        %s235 = scalar_select %p234, %s233, 1
        %s236 = smul.addr %s235, 8
        %s237 = scalar_lea.vmem %s0, %s236
        %s238 = sadd.s32 %s26, %s27
        %s239 = sadd.s32 %s26, %s27
        %p240 = scmp.lt.s32.totalorder %s239, 1
        %s241 = scalar_select %p240, %s239, 1
        %s242 = smul.addr %s241, 8
        %s243 = scalar_lea.vmem %s1, %s242
        %s244 = sadd.s32 %s26, %s27
        %p245 = scmp.eq.s32.totalorder %s27, 0
        // Predicated region
        $region33: #{tpu_custom_call.1} parent=31 // pred_check
          %p246 = pneg %p245
        $region34: #{tpu_custom_call.1} parent=31 // pred_check_branch
          %248 = sbr.rel (%p246) target = $region36
        $region35: #{tpu_custom_call.1} parent=31 // pred_region
          %vm249 = vcmask 24576
          %250 = vst.msk [vmem:[%s226] sm:$0x1] %vm249, 0.0
          %251 = vst.msk [vmem:[%s232] sm:$0x1] %vm249, 0.0
        $region36: #{tpu_custom_call.1} parent=31 // pred_fallthru
          _
        %v252 = vld [vmem:[%s237] sm:$0xff]
        %v253 = vld [vmem:[%s243] sm:$0xff]
        %s254 = sadd.s32 %s26, %s27
        %v255 = vlaneseq
        %v256 = vshrl.u32 %v255, 7
        %s257 = smul.u32 %s254, 8
        %v258 = vstv %s257
        %v259 = vadd.s32 %v258, %v256
        %vm260 = vcmp.lt.s32.totalorder %v259, 16
        %vm261 = vcmask 64512
        %v262 = vsel %vm261, %v252, -inf
        %263 = vmax.xlane.f32.xlu0 %v262
        %v264 = vpop.xlane.xlu0 %263
        %v265 = vsub.f32 %v252, %v264
        %v266 = vmul.f32 %v265, 1.442695
        %v267 = vpow.pop %v266
        %v268 = vsel %vm261, %v267, 0.0
        %269 = vadd.xlane.f32.xlu0 %v268
        %v270 = vpop.xlane.xlu0 %269
        %v271 = vlog2.pop %v270
        %v272 = vmul.f32 %v271, 0.6931472
        %v273 = vadd.f32 %v264, %v272
        %v274 = vsub.f32 %v273, %v252
        %v275 = vld [vmem:[%s2] sm:$0xff]
        %v277 = vsel %vm261, %v274, 0
        %279 = vmatprep.subr.mxu0 0.0
        %280 = vmatpush1.msra.mxu0 %v275
        %281 = vmatprep.subr.mxu0 0.0
        %282 = vmatpush1.msra.mxu0 0.0
        %283 = vmatprep.subr.mxu0 0.0
        %284 = vmatpush1.msra.mxu0 0.0
        %285 = vmatprep.subr.mxu0 0.0
        %286 = vmatpush1.msra.mxu0 0.0
        %287 = vmatprep.subr.mxu0 0.0
        %288 = vmatpush1.msra.mxu0 0.0
        %289 = vmatprep.subr.mxu0 0.0
        %290 = vmatpush1.msra.mxu0 0.0
        %291 = vmatprep.subr.mxu0 0.0
        %292 = vmatpush1.msra.mxu0 0.0
        %293 = vmatprep.subr.mxu0 0.0
        %294 = vmatpush1.msra.mxu0 0.0
        %295 = vmatprep.subr.mxu0 0.0
        %296 = vmatpush1.msra.mxu0 0.0
        %297 = vmatprep.subr.mxu0 0.0
        %298 = vmatpush1.msra.mxu0 0.0
        %299 = vmatprep.subr.mxu0 0.0
        %300 = vmatpush1.msra.mxu0 0.0
        %301 = vmatprep.subr.mxu0 0.0
        %302 = vmatpush1.msra.mxu0 0.0
        %303 = vmatprep.subr.mxu0 0.0
        %304 = vmatpush1.msra.mxu0 0.0
        %305 = vmatprep.subr.mxu0 0.0
        %306 = vmatpush1.msra.mxu0 0.0
        %307 = vmatprep.subr.mxu0 0.0
        %308 = vmatpush1.msra.mxu0 0.0
        %309 = vmatprep.subr.mxu0 0.0
        %310 = vmatpush1.msra.mxu0 0.0
        %311 = vmatprep.subr.mxu0 0.0
        %312 = vmatpush1.msra.mxu0 0.0
        %313 = vmatprep.subr.mxu0 0.0
        %314 = vmatpush1.msra.mxu0 0.0
        %315 = vmatprep.subr.mxu0 0.0
        %316 = vmatpush1.msra.mxu0 0.0
        %317 = vmatprep.subr.mxu0 0.0
        %318 = vmatpush1.msra.mxu0 0.0
        %319 = vmatprep.subr.mxu0 0.0
        %320 = vmatpush1.msra.mxu0 0.0
        %321 = vmatprep.subr.mxu0 0.0
        %322 = vmatpush1.msra.mxu0 0.0
        %323 = vmatprep.subr.mxu0 0.0
        %324 = vmatpush1.msra.mxu0 0.0
        %325 = vmatprep.subr.mxu0 0.0
        %326 = vmatpush1.msra.mxu0 0.0
        %327 = vmatprep.subr.mxu0 0.0
        %328 = vmatpush1.msra.mxu0 0.0
        %329 = vmatprep.subr.mxu0 0.0
        %330 = vmatpush1.msra.mxu0 0.0
        %331 = vmatprep.subr.mxu0 0.0
        %332 = vmatpush1.msra.mxu0 0.0
        %333 = vmatprep.subr.mxu0 0.0
        %334 = vmatpush1.msra.mxu0 0.0
        %335 = vmatprep.subr.mxu0 0.0
        %336 = vmatpush1.msra.mxu0 0.0
        %337 = vmatprep.subr.mxu0 0.0
        %338 = vmatpush1.msra.mxu0 0.0
        %339 = vmatprep.subr.mxu0 0.0
        %340 = vmatpush1.msra.mxu0 0.0
        %341 = vmatprep.subr.mxu0 0.0
        %342 = vmatpush1.msra.mxu0 0.0
        %343 = vmatprep.mubr.f32.mxu0 0.0
        %344 = vmatmul.mubr.f32.gmra.mrb[0].mxu0 %v277
        %v345 = vpop.f32.mrb[0].mxu0
        %v346 = vadd.f32 0.0, %v345
        %v347 = vpop.f32.mrb[0].mxu0
        %348 = vdwg.mxu0
        %v349 = vlaneseq
        %v350 = vand.u32 %v349, 127
        %351 = vset.pattern.permute.xlu0 0
        %352 = vperm.xlu0 %351, %v253
        %v353 = vpop.permute.xlu0 %352
        %vm354 = vcmp.eq.s32.totalorder %v350, %v353
        %v355 = vsel %vm260, 1, 0
        %vm356 = vcmp.eq.s32.totalorder %v355, 1
        %vm357 = vmand %vm354, %vm356
        %v358 = vsel %vm357, %v346, 0.0
        %vm359 = vcmask 31744
        %v360 = vsel %vm359, %v358, 0.0
        %v361 = vrot.slane %v360, 4
        %v362 = vadd.f32 %v360, %v361
        %v363 = vrot.slane %v362, 2
        %v364 = vadd.f32 %v362, %v363
        %v365 = vrot.slane %v364, 1
        %v366 = vadd.f32 %v364, %v365
        %v367 = vsel %vm357, 1.0, 0.0
        %v368 = vsel %vm359, %v367, 0.0
        %v369 = vrot.slane %v368, 4
        %v370 = vadd.f32 %v368, %v369
        %v371 = vrot.slane %v370, 2
        %v372 = vadd.f32 %v370, %v371
        %v373 = vrot.slane %v372, 1
        %v374 = vadd.f32 %v372, %v373
        %v375 = vld [vmem:[%s226] sm:$0x1]
        %v376 = vadd.f32 %v375, %v366
        %vm377 = vcmask 24576
        %378 = vst.msk [vmem:[%s226] sm:$0x1] %vm377, %v376
        %v379 = vld [vmem:[%s232] sm:$0x1]
        %v380 = vadd.f32 %v379, %v374
        %381 = vst.msk [vmem:[%s232] sm:$0x1] %vm377, %v380
        %s382 = sand.u32 %s119, 1
        %s383 = scalar_lea.sflag [#allocation3], %s382
        %s384 = sand.u32 %s119, 1
        %s385 = scalar_lea.vmem [#allocation2], %s384
        %s386 = sand.u32 %s145, 1
        %s387 = scalar_lea.sflag [#allocation5], %s386
        %s388 = sand.u32 %s145, 1
        %s389 = scalar_lea.vmem [#allocation4], %s388
        // Predicated region
        $region37: #{tpu_custom_call.1} parent=31 // pred_check
          %p390 = pneg %p129
        $region38: #{tpu_custom_call.1} parent=31 // pred_check_branch
          %392 = sbr.rel (%p390) target = $region40
        $region39: #{tpu_custom_call.1} parent=31 // pred_region
          %s394 = ssub.s32 16, 16
          %395 = vsyncadd %s383, %s394
          %s396 = smul.addr %s26, 16
          %s397 = scalar_lea.hbm %s3, %s396
          %s399 = sshll.u32 %s385, 4
          %s400 = int_to_ptr.vmem [resolvable:$true] %s399
          %402 = dma.vmem_to_hbm [thread:$0]  %s400, 16, %s397, %s383
        $region40: #{tpu_custom_call.1} parent=31 // pred_fallthru
          _
        // Predicated region
        $region41: #{tpu_custom_call.1} parent=31 // pred_check
          %p403 = pneg %p155
        $region42: #{tpu_custom_call.1} parent=31 // pred_check_branch
          %405 = sbr.rel (%p403) target = $region44
        $region43: #{tpu_custom_call.1} parent=31 // pred_region
          %s407 = ssub.s32 16, 16
          %408 = vsyncadd %s387, %s407
          %s409 = smul.addr %s26, 16
          %s410 = scalar_lea.hbm %s4, %s409
          %s412 = sshll.u32 %s389, 4
          %s413 = int_to_ptr.vmem [resolvable:$true] %s412
          %415 = dma.vmem_to_hbm [thread:$0]  %s413, 16, %s410, %s387
        $region44: #{tpu_custom_call.1} parent=31 // pred_fallthru
          _
      $region32: #{tpu_custom_call.1} parent=5 // pred_fallthru
        _
      %p416 = scmp.le.s32.totalorder 2, %s17
      // Predicated region
      $region45: #{tpu_custom_call.1} parent=5 // pred_check
        %p417 = pneg %p416
      $region46: #{tpu_custom_call.1} parent=5 // pred_check_branch
        %419 = sbr.rel (%p417) target = $region48
      $region47: #{tpu_custom_call.1} parent=5 // pred_region
        %s420 = ssub.s32 %s17, 2
        // Predicated region
        $region49: #{tpu_custom_call.1} parent=47 // pred_check
          %p421 = pneg %p135
        $region50: #{tpu_custom_call.1} parent=47 // pred_check_branch
          %423 = sbr.rel (%p421) target = $region52
        $region51: #{tpu_custom_call.1} parent=47 // pred_region
          %s424 = sand.u32 %s120, 1
          %s425 = scalar_lea.sflag [#allocation3], %s424
          %s426 = sand.u32 %s120, 1
          %s427 = scalar_lea.vmem [#allocation2], %s426
          %428 = dma.done %s425, 16
        $region52: #{tpu_custom_call.1} parent=47 // pred_fallthru
          _
        // Predicated region
        $region53: #{tpu_custom_call.1} parent=47 // pred_check
          %p429 = pneg %p161
        $region54: #{tpu_custom_call.1} parent=47 // pred_check_branch
          %431 = sbr.rel (%p429) target = $region56
        $region55: #{tpu_custom_call.1} parent=47 // pred_region
          %s432 = sand.u32 %s146, 1
          %s433 = scalar_lea.sflag [#allocation5], %s432
          %s434 = sand.u32 %s146, 1
          %s435 = scalar_lea.vmem [#allocation4], %s434
          %436 = dma.done %s433, 16
        $region56: #{tpu_custom_call.1} parent=47 // pred_fallthru
          _
      $region48: #{tpu_custom_call.1} parent=5 // pred_fallthru
        _
    $region6: #{tpu_custom_call.1} parent=1 // loop_footer
      %s21 = sadd.s32 1, %s17
    $region7: #{tpu_custom_call.1} parent=1 // loop_footer_branch
      %16 = sbr.rel target = $region3
    $region8: #{tpu_custom_call.1} parent=1 // loop_exit
      _
    %437 = vsyncpa [#allocation3], 1
    %s438 = scalar_lea.sflag [#allocation3], 1
    %439 = vsyncpa %s438, 1
    %440 = vsyncpa [#allocation5], 1
    %s441 = scalar_lea.sflag [#allocation5], 1
    %442 = vsyncpa %s441, 1

</llo_original>
